<compile_context>
chip_gen: v7x
topology: tpu7x:2x2x1
jax: 0.10.0
libtpu: 0.0.40
codegen_flags: <defaults>
</compile_context>

<pallas_src>
import jax
import jax.numpy as jnp
from jax.experimental import pallas as pl
from jax.experimental.pallas import tpu as pltpu

SUBLANE = 8


def _round_up(x, m):
    return ((x + m - 1) // m) * m


def policy_net_kernel(x_ref, w1_ref, b1_ref, w2_ref, b2_ref, out_ref):
    x = x_ref[...]                                   # (tb, n_state) f32
    tb, n_state = x.shape
    n_hidden = w1_ref.shape[1]

    if n_state <= 8:
        # fc1 on the VPU: n_state broadcast-FMAs with b1 folded into the init.
        # (K=n_state would fill <3% of an MXU pass and serialize with fc2.)
        h = jnp.broadcast_to(b1_ref[...], (tb, n_hidden))
        for k in range(n_state):                     # static unroll (tiny K)
            h = h + x[:, k:k + 1] * w1_ref[k:k + 1, :]
    else:
        h = jnp.dot(x, w1_ref[...], preferred_element_type=jnp.float32)
        h = h + b1_ref[...]
    h = jnp.maximum(h, 0.0)

    # fc2 on the MXU, f32 accumulate.
    logits = jnp.dot(h, w2_ref[...], preferred_element_type=jnp.float32)
    logits = logits + b2_ref[...]

    # Numerically-stable softmax over the (un-padded) action dim.
    m = jnp.max(logits, axis=-1, keepdims=True)
    e = jnp.exp(logits - m)
    denom = jnp.sum(e, axis=-1, keepdims=True)
    out_ref[...] = (e / denom).astype(out_ref.dtype)  # exact: rows sum to 1


def prepare_params(w1, b1, w2, b2):
    """One-time parameter prep (hoisted out of the per-call forward)."""
    return (jnp.asarray(w1, jnp.float32),
            jnp.asarray(b1, jnp.float32).reshape(1, -1),
            jnp.asarray(w2, jnp.float32),
            jnp.asarray(b2, jnp.float32).reshape(1, -1))


def policy_net_forward(x, params, *, block_b=2048):
    """x: [B, n_state]; params from prepare_params -> [B, n_action] probs (f32)."""
    w1, b1, w2, b2 = params
    B, n_state = x.shape
    n_hidden = w1.shape[1]
    n_action = w2.shape[1]

    # Pad batch only to the sublane granule (at most 7 dead rows, not a full tile).
    B_pad = _round_up(max(B, SUBLANE), SUBLANE)
    xf = x.astype(jnp.float32)
    if B_pad != B:
        xf = jnp.pad(xf, ((0, B_pad - B), (0, 0)))

    # Batch tile: aim for >=4 grid steps at large B (v7x megacore + pipeline
    # overlap); shrink to a multiple of 8 that divides B_pad so no extra pad copy.
    target = _round_up(pl.cdiv(B_pad, 4), SUBLANE)
    tb = max(SUBLANE, min(block_b, target, B_pad))
    tb = (tb // SUBLANE) * SUBLANE
    while B_pad % tb != 0:
        tb -= SUBLANE
    grid = (B_pad // tb,)

    cost = pl.CostEstimate(
        flops=2 * B_pad * (n_state * n_hidden + n_hidden * n_action),
        transcendentals=B_pad * n_action,
        bytes_accessed=4 * (B_pad * n_state + w1.size + b1.size + w2.size
                            + b2.size + B_pad * n_action))

    out = pl.pallas_call(
        policy_net_kernel,
        out_shape=jax.ShapeDtypeStruct((B_pad, n_action), jnp.float32),
        grid=grid,
        in_specs=[
            pl.BlockSpec((tb, n_state), lambda i: (i, 0)),          # x: batch-tiled
            pl.BlockSpec((n_state, n_hidden), lambda i: (0, 0)),    # W1: resident
            pl.BlockSpec((1, n_hidden), lambda i: (0, 0)),          # b1: resident
            pl.BlockSpec((n_hidden, n_action), lambda i: (0, 0)),   # W2: resident
            pl.BlockSpec((1, n_action), lambda i: (0, 0)),          # b2: resident
        ],
        out_specs=pl.BlockSpec((tb, n_action), lambda i: (i, 0)),
        compiler_params=pltpu.CompilerParams(
            dimension_semantics=("parallel",)),                     # megacore on v7x
        cost_estimate=cost,
    )(xf, w1, b1, w2, b2)

    return out[:B] if B_pad != B else out


def init_params(key, n_state, n_hidden, n_action):
    """Deterministic synthetic parameters (stored [in, out], transpose of torch)."""
    k1, k2, k3, k4 = jax.random.split(key, 4)
    lim1 = 1.0 / jnp.sqrt(n_state)
    lim2 = 1.0 / jnp.sqrt(n_hidden)
    w1 = jax.random.uniform(k1, (n_state, n_hidden), jnp.float32, -lim1, lim1)
    b1 = jax.random.uniform(k2, (n_hidden,), jnp.float32, -lim1, lim1)
    w2 = jax.random.uniform(k3, (n_hidden, n_action), jnp.float32, -lim2, lim2)
    b2 = jax.random.uniform(k4, (n_action,), jnp.float32, -lim2, lim2)
    return w1, b1, w2, b2


def _reference(x, w1, b1, w2, b2):
    h = jnp.maximum(x @ w1 + b1.reshape(1, -1), 0.0)
    logits = h @ w2 + b2.reshape(1, -1)
    return jax.nn.softmax(logits, axis=-1)


if __name__ == "__main__":
    key = jax.random.PRNGKey(0)
    kx, kp, kb = jax.random.split(key, 3)

    # Small shapes consistent with the module: batch=8 states of dim 4,
    # hidden=32, 6 discrete actions.
    B, n_state, n_hidden, n_action = 8, 4, 32, 6
    x = jax.random.normal(kx, (B, n_state), jnp.float32)
    w1, b1, w2, b2 = init_params(kp, n_state, n_hidden, n_action)
    params = prepare_params(w1, b1, w2, b2)

    # --- small batch (single grid step) ---
    probs = policy_net_forward(x, params)
    probs = jax.block_until_ready(probs)
    ref = _reference(x, w1, b1, w2, b2)

    assert probs.shape == (B, n_action)
    assert jnp.allclose(probs, ref, atol=2e-3, rtol=2e-3)
    assert jnp.allclose(jnp.sum(probs, axis=-1), 1.0, atol=1e-4)

    # --- larger ragged batch (exercises batch tiling, grid > 1, tail padding) ---
    B_big = 600
    x_big = jax.random.normal(kb, (B_big, n_state), jnp.float32)
    probs_big = policy_net_forward(x_big, params, block_b=2048)
    probs_big = jax.block_until_ready(probs_big)
    ref_big = _reference(x_big, w1, b1, w2, b2)

    assert probs_big.shape == (B_big, n_action)
    assert jnp.allclose(probs_big, ref_big, atol=2e-3, rtol=2e-3)
    assert jnp.allclose(jnp.sum(probs_big, axis=-1), 1.0, atol=1e-4)

    print("KERNEL_OK")
</pallas_src>

<mosaic_0001>
module attributes {stable_mosaic.version = 11 : i64} {
  func.func @policy_net_kernel(%arg0: i32, %arg1: memref<8x4xf32, #tpu.memory_space<vmem>>, %arg2: memref<4x32xf32, #tpu.memory_space<vmem>>, %arg3: memref<1x32xf32, #tpu.memory_space<vmem>>, %arg4: memref<32x6xf32, #tpu.memory_space<vmem>>, %arg5: memref<1x6xf32, #tpu.memory_space<vmem>>, %arg6: memref<8x6xf32, #tpu.memory_space<vmem>>) attributes {dimension_semantics = [#tpu.dimension_semantics<parallel>], iteration_bounds = array<i64: 1>, scalar_prefetch = 0 : i64, scratch_operands = 0 : i64, tpu.core_type = #tpu.core_type<tc>, window_params = [{transform_indices = @transform_0, window_bounds = array<i64: 8, 4>}, {pipeline_mode = #tpu.pipeline_mode<synchronous>, transform_indices = @transform_1, window_bounds = array<i64: 4, 32>}, {pipeline_mode = #tpu.pipeline_mode<synchronous>, transform_indices = @transform_2, window_bounds = array<i64: 1, 32>}, {pipeline_mode = #tpu.pipeline_mode<synchronous>, transform_indices = @transform_3, window_bounds = array<i64: 32, 6>}, {pipeline_mode = #tpu.pipeline_mode<synchronous>, transform_indices = @transform_4, window_bounds = array<i64: 1, 6>}, {transform_indices = @transform_5, window_bounds = array<i64: 8, 6>}]} {
    %c0 = arith.constant 0 : index
    %c0_0 = arith.constant 0 : index
    %0 = vector.load %arg1[%c0, %c0_0] : memref<8x4xf32, #tpu.memory_space<vmem>>, vector<8x4xf32>
    %c0_1 = arith.constant 0 : index
    %c0_2 = arith.constant 0 : index
    %1 = vector.load %arg3[%c0_1, %c0_2] : memref<1x32xf32, #tpu.memory_space<vmem>>, vector<1x32xf32>
    %2 = vector.shape_cast %1 : vector<1x32xf32> to vector<1x32xf32>
    %3 = vector.broadcast %2 : vector<1x32xf32> to vector<8x32xf32>
    %4 = vector.extract_strided_slice %0 {offsets = [0, 0], sizes = [8, 1], strides = [1, 1]} : vector<8x4xf32> to vector<8x1xf32>
    %c0_3 = arith.constant 0 : index
    %c0_4 = arith.constant 0 : index
    %5 = vector.load %arg2[%c0_3, %c0_4] : memref<4x32xf32, #tpu.memory_space<vmem>>, vector<1x32xf32>
    %6 = vector.broadcast %4 : vector<8x1xf32> to vector<8x32xf32>
    %7 = vector.broadcast %5 : vector<1x32xf32> to vector<8x32xf32>
    %8 = arith.mulf %6, %7 : vector<8x32xf32>
    %9 = arith.addf %3, %8 : vector<8x32xf32>
    %10 = vector.extract_strided_slice %0 {offsets = [0, 1], sizes = [8, 1], strides = [1, 1]} : vector<8x4xf32> to vector<8x1xf32>
    %c1 = arith.constant 1 : index
    %c0_5 = arith.constant 0 : index
    %11 = vector.load %arg2[%c1, %c0_5] : memref<4x32xf32, #tpu.memory_space<vmem>>, vector<1x32xf32>
    %12 = vector.broadcast %10 : vector<8x1xf32> to vector<8x32xf32>
    %13 = vector.broadcast %11 : vector<1x32xf32> to vector<8x32xf32>
    %14 = arith.mulf %12, %13 : vector<8x32xf32>
    %15 = arith.addf %9, %14 : vector<8x32xf32>
    %16 = vector.extract_strided_slice %0 {offsets = [0, 2], sizes = [8, 1], strides = [1, 1]} : vector<8x4xf32> to vector<8x1xf32>
    %c2 = arith.constant 2 : index
    %c0_6 = arith.constant 0 : index
    %17 = vector.load %arg2[%c2, %c0_6] : memref<4x32xf32, #tpu.memory_space<vmem>>, vector<1x32xf32>
    %18 = vector.broadcast %16 : vector<8x1xf32> to vector<8x32xf32>
    %19 = vector.broadcast %17 : vector<1x32xf32> to vector<8x32xf32>
    %20 = arith.mulf %18, %19 : vector<8x32xf32>
    %21 = arith.addf %15, %20 : vector<8x32xf32>
    %22 = vector.extract_strided_slice %0 {offsets = [0, 3], sizes = [8, 1], strides = [1, 1]} : vector<8x4xf32> to vector<8x1xf32>
    %c3 = arith.constant 3 : index
    %c0_7 = arith.constant 0 : index
    %23 = vector.load %arg2[%c3, %c0_7] : memref<4x32xf32, #tpu.memory_space<vmem>>, vector<1x32xf32>
    %24 = vector.broadcast %22 : vector<8x1xf32> to vector<8x32xf32>
    %25 = vector.broadcast %23 : vector<1x32xf32> to vector<8x32xf32>
    %26 = arith.mulf %24, %25 : vector<8x32xf32>
    %27 = arith.addf %21, %26 : vector<8x32xf32>
    %cst = arith.constant 0.000000e+00 : f32
    %28 = vector.broadcast %cst : f32 to vector<8x32xf32>
    %29 = arith.maximumf %27, %28 : vector<8x32xf32>
    %c0_8 = arith.constant 0 : index
    %c0_9 = arith.constant 0 : index
    %30 = vector.load %arg4[%c0_8, %c0_9] : memref<32x6xf32, #tpu.memory_space<vmem>>, vector<32x6xf32>
    %cst_10 = arith.constant dense<0.000000e+00> : vector<8x6xf32>
    %31 = tpu.matmul %29, %30, %cst_10 {dimension_numbers = #tpu.dot_dimension_numbers<[1], [0], [0], [1], [0, 0, 1, 1], [], []>} : vector<8x32xf32>, vector<32x6xf32>, vector<8x6xf32> -> vector<8x6xf32>
    %c0_11 = arith.constant 0 : index
    %c0_12 = arith.constant 0 : index
    %32 = vector.load %arg5[%c0_11, %c0_12] : memref<1x6xf32, #tpu.memory_space<vmem>>, vector<1x6xf32>
    %33 = vector.broadcast %32 : vector<1x6xf32> to vector<8x6xf32>
    %34 = arith.addf %31, %33 : vector<8x6xf32>
    %cst_13 = arith.constant dense<0xFF800000> : vector<8xf32>
    %35 = vector.multi_reduction <maximumf>, %34, %cst_13 [1] : vector<8x6xf32> to vector<8xf32>
    %36 = vector.shape_cast %35 : vector<8xf32> to vector<8x1xf32>
    %37 = vector.broadcast %36 : vector<8x1xf32> to vector<8x6xf32>
    %38 = arith.subf %34, %37 : vector<8x6xf32>
    %39 = math.exp %38 : vector<8x6xf32>
    %cst_14 = arith.constant dense<0.000000e+00> : vector<8xf32>
    %40 = vector.multi_reduction <add>, %39, %cst_14 [1] : vector<8x6xf32> to vector<8xf32>
    %41 = vector.shape_cast %40 : vector<8xf32> to vector<8x1xf32>
    %42 = vector.broadcast %41 : vector<8x1xf32> to vector<8x6xf32>
    %43 = arith.divf %39, %42 : vector<8x6xf32>
    %c0_15 = arith.constant 0 : index
    %c0_16 = arith.constant 0 : index
    %44 = vector.load %arg6[%c0_15, %c0_16] : memref<8x6xf32, #tpu.memory_space<vmem>>, vector<8x6xf32>
    tpu.vector_store %arg6[%c0_15, %c0_16], %43 {strides = array<i32>} : memref<8x6xf32, #tpu.memory_space<vmem>>, vector<8x6xf32>,
    return
  }
  func.func @transform_0(%arg0: i32) -> (i32, i32) {
    %c0_i32 = arith.constant 0 : i32
    %c0_i32_0 = arith.constant 0 : i32
    return %arg0, %c0_i32 : i32, i32
  }
  func.func @transform_1(%arg0: i32) -> (i32, i32) {
    %c0_i32 = arith.constant 0 : i32
    %c0_i32_0 = arith.constant 0 : i32
    %c0_i32_1 = arith.constant 0 : i32
    return %c0_i32, %c0_i32_0 : i32, i32
  }
  func.func @transform_2(%arg0: i32) -> (i32, i32) {
    %c0_i32 = arith.constant 0 : i32
    %c0_i32_0 = arith.constant 0 : i32
    %c0_i32_1 = arith.constant 0 : i32
    return %c0_i32, %c0_i32_0 : i32, i32
  }
  func.func @transform_3(%arg0: i32) -> (i32, i32) {
    %c0_i32 = arith.constant 0 : i32
    %c0_i32_0 = arith.constant 0 : i32
    %c0_i32_1 = arith.constant 0 : i32
    return %c0_i32, %c0_i32_0 : i32, i32
  }
  func.func @transform_4(%arg0: i32) -> (i32, i32) {
    %c0_i32 = arith.constant 0 : i32
    %c0_i32_0 = arith.constant 0 : i32
    %c0_i32_1 = arith.constant 0 : i32
    return %c0_i32, %c0_i32_0 : i32, i32
  }
  func.func @transform_5(%arg0: i32) -> (i32, i32) {
    %c0_i32 = arith.constant 0 : i32
    %c0_i32_0 = arith.constant 0 : i32
    return %arg0, %c0_i32 : i32, i32
  }
}

</mosaic_0001>

<llo_original>
// kernel: tpu_custom_call.1
$region0: #{tpu_custom_call.1}
  #allocation0 [shape = 'u32[]', space=smem, size = 0x4, offset = 0x4, fixed_abs, tag = 'smem constant byte address 0x4 - core index']
  #allocation1 [shape = 'u32[144,128]{1,0:T(1,128)}', space=vmem, size = 0x12000, scoped, tag = 'internal scratch']
  %s0 = inlined_call_operand.vmem [shape: f32[8,4], index: 0, kind: input, shape index: {}]
  %s1 = inlined_call_operand.vmem [shape: f32[4,32], index: 1, kind: input, shape index: {}]
  %s2 = inlined_call_operand.vmem [shape: f32[1,32], index: 2, kind: input, shape index: {}]
  %s3 = inlined_call_operand.vmem [shape: f32[32,6], index: 3, kind: input, shape index: {}]
  %s4 = inlined_call_operand.vmem [shape: f32[1,6], index: 4, kind: input, shape index: {}]
  %s5 = inlined_call_operand.hbm [shape: f32[8,6], index: 5, kind: output, shape index: {}]
  %s6 = sld [smem:[#allocation0]]
  $region30: #{tpu_custom_call.1} parent=0
    _
  %s8 = ssub.s32 1, %s6
  %s9 = scalar_select 0, %s8, %s6
  $region1: #{tpu_custom_call.1} parent=0
    #allocation2 [shape = 'u8[4096]{0}', space=vmem, size = 0x1000, scoped, tag = 'output window, operand 0, single buffered']
    #allocation3 [shape = 's32[1]{0}', space=sflag, size = 0x4, scoped, tag = 'scoped memory for tpu_custom_call.1']
    %10 = vsyncpa [#allocation3], 0
    // Predicated region
    $region2: #{tpu_custom_call.1} parent=1 // pred_check
      _
    $region3: #{tpu_custom_call.1} parent=1 // pred_check_branch
      %12 = sbr.rel (0) target = $region5
    $region4: #{tpu_custom_call.1} parent=1 // pred_region
      _
    $region5: #{tpu_custom_call.1} parent=1 // pred_fallthru
      _
    // Predicated region
    $region6: #{tpu_custom_call.1} parent=1 // pred_check
      _
    $region7: #{tpu_custom_call.1} parent=1 // pred_check_branch
      %14 = sbr.rel (0) target = $region9
    $region8: #{tpu_custom_call.1} parent=1 // pred_region
      _
    $region9: #{tpu_custom_call.1} parent=1 // pred_fallthru
      _
    // Predicated region
    $region10: #{tpu_custom_call.1} parent=1 // pred_check
      _
    $region11: #{tpu_custom_call.1} parent=1 // pred_check_branch
      %16 = sbr.rel (0) target = $region13
    $region12: #{tpu_custom_call.1} parent=1 // pred_region
      _
    $region13: #{tpu_custom_call.1} parent=1 // pred_fallthru
      _
    // Predicated region
    $region14: #{tpu_custom_call.1} parent=1 // pred_check
      _
    $region15: #{tpu_custom_call.1} parent=1 // pred_check_branch
      %18 = sbr.rel (0) target = $region17
    $region16: #{tpu_custom_call.1} parent=1 // pred_region
      _
    $region17: #{tpu_custom_call.1} parent=1 // pred_fallthru
      _
    // Predicated region
    $region18: #{tpu_custom_call.1} parent=1 // pred_check
      _
    $region19: #{tpu_custom_call.1} parent=1 // pred_check_branch
      %20 = sbr.rel (0) target = $region21
    $region20: #{tpu_custom_call.1} parent=1 // pred_region
      _
    $region21: #{tpu_custom_call.1} parent=1 // pred_fallthru
      _
    %v21 = vld [vmem:[%s0] sm:$0xff]
    %v22 = vld [vmem:[%s2] sm:$0x1]
    %v24 = vlaneseq
    %v25 = vshrl.u32 %v24, 7
    %v26 = vsub.s32 0, %v25
    %v27 = vrot.slane %v22, %v26
    %v29 = vld [vmem:[%s1] sm:$0x1]
    %31 = vset.pattern.permute.xlu0 0
    %32 = vperm.xlu0 %31, %v21
    %v33 = vpop.permute.xlu0 %32
    %v35 = vlaneseq
    %v36 = vshrl.u32 %v35, 7
    %v37 = vsub.s32 0, %v36
    %v38 = vrot.slane %v29, %v37
    %v39 = vmul.f32 %v33, %v38
    %v40 = vadd.f32 %v27, %v39
    %v41 = vld [vmem:[%s1 + $0x1] sm:$0x1]
    %42 = vset.pattern.permute.xlu0 1
    %43 = vperm.xlu0 %42, %v21
    %v44 = vpop.permute.xlu0 %43
    %v46 = vlaneseq
    %v47 = vshrl.u32 %v46, 7
    %v48 = vsub.s32 0, %v47
    %v49 = vrot.slane %v41, %v48
    %v50 = vmul.f32 %v44, %v49
    %v51 = vadd.f32 %v40, %v50
    %v52 = vld [vmem:[%s1 + $0x2] sm:$0x1]
    %53 = vset.pattern.permute.xlu0 2
    %54 = vperm.xlu0 %53, %v21
    %v55 = vpop.permute.xlu0 %54
    %v57 = vlaneseq
    %v58 = vshrl.u32 %v57, 7
    %v59 = vsub.s32 0, %v58
    %v60 = vrot.slane %v52, %v59
    %v61 = vmul.f32 %v55, %v60
    %v62 = vadd.f32 %v51, %v61
    %v63 = vld [vmem:[%s1 + $0x3] sm:$0x1]
    %64 = vset.pattern.permute.xlu0 3
    %65 = vperm.xlu0 %64, %v21
    %v66 = vpop.permute.xlu0 %65
    %v68 = vlaneseq
    %v69 = vshrl.u32 %v68, 7
    %v70 = vsub.s32 0, %v69
    %v71 = vrot.slane %v63, %v70
    %v72 = vmul.f32 %v66, %v71
    %v73 = vadd.f32 %v62, %v72
    %v74 = vmax.f32 %v73, 0.0
    %v75 = vld [vmem:[%s3] sm:$0xff]
    %v76 = vld [vmem:[%s3 + $0x8] sm:$0xff]
    %v77 = vld [vmem:[%s3 + $0x10] sm:$0xff]
    %v78 = vld [vmem:[%s3 + $0x18] sm:$0xff]
    %v79 = vld [vmem:[%s4] sm:$0x1]
    %v81 = vlaneseq
    %v82 = vshrl.u32 %v81, 7
    %v83 = vsub.s32 0, %v82
    %v84 = vrot.slane %v79, %v83
    %vm86 = vcmask 261120
    %v88 = vsel %vm86, %v74, 0
    %90 = vmatprep.subr.mxu0 0.0
    %91 = vmatpush1.msra.mxu0 %v75
    %92 = vmatprep.subr.mxu0 0.0
    %93 = vmatpush1.msra.mxu0 %v76
    %94 = vmatprep.subr.mxu0 0.0
    %95 = vmatpush1.msra.mxu0 %v77
    %96 = vmatprep.subr.mxu0 0.0
    %97 = vmatpush1.msra.mxu0 %v78
    %98 = vmatprep.subr.mxu0 0.0
    %99 = vmatpush1.msra.mxu0 0.0
    %100 = vmatprep.subr.mxu0 0.0
    %101 = vmatpush1.msra.mxu0 0.0
    %102 = vmatprep.subr.mxu0 0.0
    %103 = vmatpush1.msra.mxu0 0.0
    %104 = vmatprep.subr.mxu0 0.0
    %105 = vmatpush1.msra.mxu0 0.0
    %106 = vmatprep.subr.mxu0 0.0
    %107 = vmatpush1.msra.mxu0 0.0
    %108 = vmatprep.subr.mxu0 0.0
    %109 = vmatpush1.msra.mxu0 0.0
    %110 = vmatprep.subr.mxu0 0.0
    %111 = vmatpush1.msra.mxu0 0.0
    %112 = vmatprep.subr.mxu0 0.0
    %113 = vmatpush1.msra.mxu0 0.0
    %114 = vmatprep.subr.mxu0 0.0
    %115 = vmatpush1.msra.mxu0 0.0
    %116 = vmatprep.subr.mxu0 0.0
    %117 = vmatpush1.msra.mxu0 0.0
    %118 = vmatprep.subr.mxu0 0.0
    %119 = vmatpush1.msra.mxu0 0.0
    %120 = vmatprep.subr.mxu0 0.0
    %121 = vmatpush1.msra.mxu0 0.0
    %122 = vmatprep.subr.mxu0 0.0
    %123 = vmatpush1.msra.mxu0 0.0
    %124 = vmatprep.subr.mxu0 0.0
    %125 = vmatpush1.msra.mxu0 0.0
    %126 = vmatprep.subr.mxu0 0.0
    %127 = vmatpush1.msra.mxu0 0.0
    %128 = vmatprep.subr.mxu0 0.0
    %129 = vmatpush1.msra.mxu0 0.0
    %130 = vmatprep.subr.mxu0 0.0
    %131 = vmatpush1.msra.mxu0 0.0
    %132 = vmatprep.subr.mxu0 0.0
    %133 = vmatpush1.msra.mxu0 0.0
    %134 = vmatprep.subr.mxu0 0.0
    %135 = vmatpush1.msra.mxu0 0.0
    %136 = vmatprep.subr.mxu0 0.0
    %137 = vmatpush1.msra.mxu0 0.0
    %138 = vmatprep.subr.mxu0 0.0
    %139 = vmatpush1.msra.mxu0 0.0
    %140 = vmatprep.subr.mxu0 0.0
    %141 = vmatpush1.msra.mxu0 0.0
    %142 = vmatprep.subr.mxu0 0.0
    %143 = vmatpush1.msra.mxu0 0.0
    %144 = vmatprep.subr.mxu0 0.0
    %145 = vmatpush1.msra.mxu0 0.0
    %146 = vmatprep.subr.mxu0 0.0
    %147 = vmatpush1.msra.mxu0 0.0
    %148 = vmatprep.subr.mxu0 0.0
    %149 = vmatpush1.msra.mxu0 0.0
    %150 = vmatprep.subr.mxu0 0.0
    %151 = vmatpush1.msra.mxu0 0.0
    %152 = vmatprep.subr.mxu0 0.0
    %153 = vmatpush1.msra.mxu0 0.0
    %154 = vmatprep.mubr.f32.mxu0 0.0
    %155 = vmatmul.mubr.f32.gmra.mrb[0].mxu0 %v88
    %v156 = vpop.f32.mrb[0].mxu0
    %v157 = vadd.f32 %v84, %v156
    %v158 = vpop.f32.mrb[0].mxu0
    %159 = vdwg.mxu0
    %vm160 = vcmask 48128
    %v161 = vsel %vm160, %v157, -inf
    %162 = vmax.xlane.f32.xlu0 %v161
    %v163 = vpop.xlane.xlu0 %162
    %v164 = vsub.f32 %v157, %v163
    %v165 = vmul.f32 %v164, 1.442695
    %v166 = vpow.pop %v165
    %v167 = vsel %vm160, %v166, 0.0
    %168 = vadd.xlane.f32.xlu0 %v167
    %v169 = vpop.xlane.xlu0 %168
    %v170 = vrcp.pop %v169
    %v171 = vmul.f32 %v166, %v170
    %172 = vst.msk [vmem:[#allocation2] sm:$0xff] %vm160, %v171
    // Predicated region
    $region22: #{tpu_custom_call.1} parent=1 // pred_check
      _
    $region23: #{tpu_custom_call.1} parent=1 // pred_check_branch
      %174 = sbr.rel (0) target = $region25
    $region24: #{tpu_custom_call.1} parent=1 // pred_region
      %s176 = ssub.s32 128, 128
      %177 = vsyncadd [#allocation3], %s176
      %s179 = sshll.u32 [#allocation2], 4
      %s180 = int_to_ptr.vmem [resolvable:$true] %s179
      %182 = dma.vmem_to_hbm [thread:$0]  %s180, 128, %s5, [#allocation3]
    $region25: #{tpu_custom_call.1} parent=1 // pred_fallthru
      _
    // Predicated region
    $region26: #{tpu_custom_call.1} parent=1 // pred_check
      _
    $region27: #{tpu_custom_call.1} parent=1 // pred_check_branch
      %184 = sbr.rel (0) target = $region29
    $region28: #{tpu_custom_call.1} parent=1 // pred_region
      %185 = dma.done [#allocation3], 128
    $region29: #{tpu_custom_call.1} parent=1 // pred_fallthru
      _
    %186 = vsyncpa [#allocation3], 1

</llo_original>
